<compile_context>
chip_gen: v7x
topology: tpu7x:2x2x1
jax: 0.10.0
libtpu: 0.0.40
codegen_flags: <defaults>
</compile_context>

<pallas_src>
import functools

import jax
import jax.numpy as jnp
from jax.experimental import pallas as pl
from jax.experimental.pallas import tpu as pltpu

HIDDEN = (64, 32, 8)
PAD_OUT = 128            # lane-dense padded width of the final layer
DEFAULT_TILE_B = 4096    # batch rows per grid step


def dqn_kernel(x_ref,
               w1_ref, b1_ref,
               w2_ref, b2_ref,
               w3_ref, b3_ref,
               w4_ref, b4_ref,
               out_ref):
    """Fused 4-layer MLP: bf16 matmuls on the MXU, f32 accumulation, fused bias+ReLU."""
    x = x_ref[...]                                                        # (tb, S) bf16

    h = jnp.dot(x, w1_ref[...], preferred_element_type=jnp.float32) + b1_ref[...]
    h = jnp.maximum(h, 0.0).astype(jnp.bfloat16)

    h = jnp.dot(h, w2_ref[...], preferred_element_type=jnp.float32) + b2_ref[...]
    h = jnp.maximum(h, 0.0).astype(jnp.bfloat16)

    h = jnp.dot(h, w3_ref[...], preferred_element_type=jnp.float32) + b3_ref[...]
    h = jnp.maximum(h, 0.0).astype(jnp.bfloat16)

    y = jnp.dot(h, w4_ref[...], preferred_element_type=jnp.float32) + b4_ref[...]
    out_ref[...] = y.astype(out_ref.dtype)                                # (tb, 128) f32


def _round_up(n, m):
    return ((n + m - 1) // m) * m


def _prepare_params(params):
    """Cast weights to bf16, keep biases f32, zero-pad the last layer to PAD_OUT lanes."""
    prepped = []
    last = len(params) - 1
    for i, (w, b) in enumerate(params):
        w = w.astype(jnp.bfloat16)
        b = b.astype(jnp.float32)
        if i == last:
            pad = PAD_OUT - w.shape[1]
            w = jnp.pad(w, ((0, 0), (0, pad)))
            b = jnp.pad(b, ((0, 0), (0, pad)))
        prepped.append((w, b))
    return prepped


@functools.partial(jax.jit, static_argnames=("tile_b",))
def dqn_forward(x, params, tile_b=DEFAULT_TILE_B):
    """x: (B, state_size); params: list of (W (in,out) f32, b (1,out) f32). Returns (B, action_size) f32."""
    B, S = x.shape
    action_size = params[-1][0].shape[1]

    (w1, b1), (w2, b2), (w3, b3), (w4, b4) = _prepare_params(params)

    # Batch tile: multiple of 8 (sublane), capped by the requested tile size.
    tb = min(tile_b, _round_up(B, 8))
    Bp = _round_up(B, tb)

    xb = x.astype(jnp.bfloat16)
    if Bp != B:
        xb = jnp.pad(xb, ((0, Bp - B), (0, 0)))

    grid = (Bp // tb,)

    def const_spec(shape):
        # Same block every grid step -> weights/biases stay resident in VMEM.
        return pl.BlockSpec(shape, lambda i: (0, 0))

    out_padded = pl.pallas_call(
        dqn_kernel,
        out_shape=jax.ShapeDtypeStruct((Bp, PAD_OUT), jnp.float32),
        grid=grid,
        in_specs=[
            pl.BlockSpec((tb, S), lambda i: (i, 0)),   # x: pipelined batch tiles
            const_spec(w1.shape), const_spec(b1.shape),
            const_spec(w2.shape), const_spec(b2.shape),
            const_spec(w3.shape), const_spec(b3.shape),
            const_spec(w4.shape), const_spec(b4.shape),
        ],
        out_specs=pl.BlockSpec((tb, PAD_OUT), lambda i: (i, 0)),
        compiler_params=pltpu.CompilerParams(
            dimension_semantics=("parallel",),          # megacore sharding on v7x
        ),
    )(xb, w1, b1, w2, b2, w3, b3, w4, b4)

    return out_padded[:B, :action_size]


def init_params(key, state_size, action_size):
    """Deterministic init mimicking nn.Linear default (uniform +- 1/sqrt(fan_in))."""
    dims = [state_size, *HIDDEN, action_size]
    params = []
    for i in range(4):
        fan_in, fan_out = dims[i], dims[i + 1]
        key, kw, kb = jax.random.split(key, 3)
        bound = 1.0 / jnp.sqrt(fan_in)
        # PyTorch stores weight as (out, in); we store the transposed (in, out) layout.
        w = jax.random.uniform(kw, (fan_in, fan_out), jnp.float32, -bound, bound)
        b = jax.random.uniform(kb, (1, fan_out), jnp.float32, -bound, bound)
        params.append((w, b))
    return params


def dqn_reference_bf16(x, params):
    """Pure-JAX reference emulating the kernel's bf16-matmul / f32-accumulate arithmetic."""
    h = x.astype(jnp.bfloat16)
    for i, (w, b) in enumerate(params):
        h = jnp.dot(h, w.astype(jnp.bfloat16),
                    preferred_element_type=jnp.float32) + b.astype(jnp.float32)
        if i < len(params) - 1:
            h = jnp.maximum(h, 0.0).astype(jnp.bfloat16)
    return h


if __name__ == "__main__":
    key = jax.random.PRNGKey(0)
    batch, state_size, action_size = 2, 16, 4

    key, kx = jax.random.split(key)
    x = jax.random.normal(kx, (batch, state_size), jnp.float32)
    params = init_params(key, state_size, action_size)

    out = dqn_forward(x, params)
    jax.block_until_ready(out)

    ref = dqn_reference_bf16(x, params)
    assert out.shape == (batch, action_size)
    assert jnp.allclose(out, ref, atol=1e-3, rtol=1e-3), "mismatch vs reference"

    print("KERNEL_OK")
</pallas_src>

<mosaic_0001>
module attributes {stable_mosaic.version = 11 : i64} {
  func.func @dqn_kernel(%arg0: i32, %arg1: memref<8x16xbf16, #tpu.memory_space<vmem>>, %arg2: memref<16x64xbf16, #tpu.memory_space<vmem>>, %arg3: memref<1x64xf32, #tpu.memory_space<vmem>>, %arg4: memref<64x32xbf16, #tpu.memory_space<vmem>>, %arg5: memref<1x32xf32, #tpu.memory_space<vmem>>, %arg6: memref<32x8xbf16, #tpu.memory_space<vmem>>, %arg7: memref<1x8xf32, #tpu.memory_space<vmem>>, %arg8: memref<8x128xbf16, #tpu.memory_space<vmem>>, %arg9: memref<1x128xf32, #tpu.memory_space<vmem>>, %arg10: memref<8x128xf32, #tpu.memory_space<vmem>>) attributes {dimension_semantics = [#tpu.dimension_semantics<parallel>], iteration_bounds = array<i64: 1>, scalar_prefetch = 0 : i64, scratch_operands = 0 : i64, tpu.core_type = #tpu.core_type<tc>, window_params = [{transform_indices = @transform_0, window_bounds = array<i64: 8, 16>}, {pipeline_mode = #tpu.pipeline_mode<synchronous>, transform_indices = @transform_1, window_bounds = array<i64: 16, 64>}, {pipeline_mode = #tpu.pipeline_mode<synchronous>, transform_indices = @transform_2, window_bounds = array<i64: 1, 64>}, {pipeline_mode = #tpu.pipeline_mode<synchronous>, transform_indices = @transform_3, window_bounds = array<i64: 64, 32>}, {pipeline_mode = #tpu.pipeline_mode<synchronous>, transform_indices = @transform_4, window_bounds = array<i64: 1, 32>}, {pipeline_mode = #tpu.pipeline_mode<synchronous>, transform_indices = @transform_5, window_bounds = array<i64: 32, 8>}, {pipeline_mode = #tpu.pipeline_mode<synchronous>, transform_indices = @transform_6, window_bounds = array<i64: 1, 8>}, {pipeline_mode = #tpu.pipeline_mode<synchronous>, transform_indices = @transform_7, window_bounds = array<i64: 8, 128>}, {pipeline_mode = #tpu.pipeline_mode<synchronous>, transform_indices = @transform_8, window_bounds = array<i64: 1, 128>}, {transform_indices = @transform_9, window_bounds = array<i64: 8, 128>}]} {
    %c0 = arith.constant 0 : index
    %c0_0 = arith.constant 0 : index
    %0 = vector.load %arg1[%c0, %c0_0] : memref<8x16xbf16, #tpu.memory_space<vmem>>, vector<8x16xbf16>
    %c0_1 = arith.constant 0 : index
    %c0_2 = arith.constant 0 : index
    %1 = vector.load %arg2[%c0_1, %c0_2] : memref<16x64xbf16, #tpu.memory_space<vmem>>, vector<16x64xbf16>
    %cst = arith.constant dense<0.000000e+00> : vector<8x64xf32>
    %2 = tpu.matmul %0, %1, %cst {dimension_numbers = #tpu.dot_dimension_numbers<[1], [0], [0], [1], [0, 0, 1, 1], [], []>} : vector<8x16xbf16>, vector<16x64xbf16>, vector<8x64xf32> -> vector<8x64xf32>
    %c0_3 = arith.constant 0 : index
    %c0_4 = arith.constant 0 : index
    %3 = vector.load %arg3[%c0_3, %c0_4] : memref<1x64xf32, #tpu.memory_space<vmem>>, vector<1x64xf32>
    %4 = vector.broadcast %3 : vector<1x64xf32> to vector<8x64xf32>
    %5 = arith.addf %2, %4 : vector<8x64xf32>
    %cst_5 = arith.constant 0.000000e+00 : f32
    %6 = vector.broadcast %cst_5 : f32 to vector<8x64xf32>
    %7 = arith.maximumf %5, %6 : vector<8x64xf32>
    %8 = arith.truncf %7 : vector<8x64xf32> to vector<8x64xbf16>
    %c0_6 = arith.constant 0 : index
    %c0_7 = arith.constant 0 : index
    %9 = vector.load %arg4[%c0_6, %c0_7] : memref<64x32xbf16, #tpu.memory_space<vmem>>, vector<64x32xbf16>
    %cst_8 = arith.constant dense<0.000000e+00> : vector<8x32xf32>
    %10 = tpu.matmul %8, %9, %cst_8 {dimension_numbers = #tpu.dot_dimension_numbers<[1], [0], [0], [1], [0, 0, 1, 1], [], []>} : vector<8x64xbf16>, vector<64x32xbf16>, vector<8x32xf32> -> vector<8x32xf32>
    %c0_9 = arith.constant 0 : index
    %c0_10 = arith.constant 0 : index
    %11 = vector.load %arg5[%c0_9, %c0_10] : memref<1x32xf32, #tpu.memory_space<vmem>>, vector<1x32xf32>
    %12 = vector.broadcast %11 : vector<1x32xf32> to vector<8x32xf32>
    %13 = arith.addf %10, %12 : vector<8x32xf32>
    %cst_11 = arith.constant 0.000000e+00 : f32
    %14 = vector.broadcast %cst_11 : f32 to vector<8x32xf32>
    %15 = arith.maximumf %13, %14 : vector<8x32xf32>
    %16 = arith.truncf %15 : vector<8x32xf32> to vector<8x32xbf16>
    %c0_12 = arith.constant 0 : index
    %c0_13 = arith.constant 0 : index
    %17 = vector.load %arg6[%c0_12, %c0_13] : memref<32x8xbf16, #tpu.memory_space<vmem>>, vector<32x8xbf16>
    %cst_14 = arith.constant dense<0.000000e+00> : vector<8x8xf32>
    %18 = tpu.matmul %16, %17, %cst_14 {dimension_numbers = #tpu.dot_dimension_numbers<[1], [0], [0], [1], [0, 0, 1, 1], [], []>} : vector<8x32xbf16>, vector<32x8xbf16>, vector<8x8xf32> -> vector<8x8xf32>
    %c0_15 = arith.constant 0 : index
    %c0_16 = arith.constant 0 : index
    %19 = vector.load %arg7[%c0_15, %c0_16] : memref<1x8xf32, #tpu.memory_space<vmem>>, vector<1x8xf32>
    %20 = vector.broadcast %19 : vector<1x8xf32> to vector<8x8xf32>
    %21 = arith.addf %18, %20 : vector<8x8xf32>
    %cst_17 = arith.constant 0.000000e+00 : f32
    %22 = vector.broadcast %cst_17 : f32 to vector<8x8xf32>
    %23 = arith.maximumf %21, %22 : vector<8x8xf32>
    %24 = arith.truncf %23 : vector<8x8xf32> to vector<8x8xbf16>
    %c0_18 = arith.constant 0 : index
    %c0_19 = arith.constant 0 : index
    %25 = vector.load %arg8[%c0_18, %c0_19] : memref<8x128xbf16, #tpu.memory_space<vmem>>, vector<8x128xbf16>
    %cst_20 = arith.constant dense<0.000000e+00> : vector<8x128xf32>
    %26 = tpu.matmul %24, %25, %cst_20 {dimension_numbers = #tpu.dot_dimension_numbers<[1], [0], [0], [1], [0, 0, 1, 1], [], []>} : vector<8x8xbf16>, vector<8x128xbf16>, vector<8x128xf32> -> vector<8x128xf32>
    %c0_21 = arith.constant 0 : index
    %c0_22 = arith.constant 0 : index
    %27 = vector.load %arg9[%c0_21, %c0_22] : memref<1x128xf32, #tpu.memory_space<vmem>>, vector<1x128xf32>
    %28 = vector.broadcast %27 : vector<1x128xf32> to vector<8x128xf32>
    %29 = arith.addf %26, %28 : vector<8x128xf32>
    %c0_23 = arith.constant 0 : index
    %c0_24 = arith.constant 0 : index
    %30 = vector.load %arg10[%c0_23, %c0_24] : memref<8x128xf32, #tpu.memory_space<vmem>>, vector<8x128xf32>
    tpu.vector_store %arg10[%c0_23, %c0_24], %29 {strides = array<i32>} : memref<8x128xf32, #tpu.memory_space<vmem>>, vector<8x128xf32>,
    return
  }
  func.func @transform_0(%arg0: i32) -> (i32, i32) {
    %c0_i32 = arith.constant 0 : i32
    %c0_i32_0 = arith.constant 0 : i32
    return %arg0, %c0_i32 : i32, i32
  }
  func.func @transform_1(%arg0: i32) -> (i32, i32) {
    %c0_i32 = arith.constant 0 : i32
    %c0_i32_0 = arith.constant 0 : i32
    %c0_i32_1 = arith.constant 0 : i32
    return %c0_i32, %c0_i32_0 : i32, i32
  }
  func.func @transform_2(%arg0: i32) -> (i32, i32) {
    %c0_i32 = arith.constant 0 : i32
    %c0_i32_0 = arith.constant 0 : i32
    %c0_i32_1 = arith.constant 0 : i32
    return %c0_i32, %c0_i32_0 : i32, i32
  }
  func.func @transform_3(%arg0: i32) -> (i32, i32) {
    %c0_i32 = arith.constant 0 : i32
    %c0_i32_0 = arith.constant 0 : i32
    %c0_i32_1 = arith.constant 0 : i32
    return %c0_i32, %c0_i32_0 : i32, i32
  }
  func.func @transform_4(%arg0: i32) -> (i32, i32) {
    %c0_i32 = arith.constant 0 : i32
    %c0_i32_0 = arith.constant 0 : i32
    %c0_i32_1 = arith.constant 0 : i32
    return %c0_i32, %c0_i32_0 : i32, i32
  }
  func.func @transform_5(%arg0: i32) -> (i32, i32) {
    %c0_i32 = arith.constant 0 : i32
    %c0_i32_0 = arith.constant 0 : i32
    %c0_i32_1 = arith.constant 0 : i32
    return %c0_i32, %c0_i32_0 : i32, i32
  }
  func.func @transform_6(%arg0: i32) -> (i32, i32) {
    %c0_i32 = arith.constant 0 : i32
    %c0_i32_0 = arith.constant 0 : i32
    %c0_i32_1 = arith.constant 0 : i32
    return %c0_i32, %c0_i32_0 : i32, i32
  }
  func.func @transform_7(%arg0: i32) -> (i32, i32) {
    %c0_i32 = arith.constant 0 : i32
    %c0_i32_0 = arith.constant 0 : i32
    %c0_i32_1 = arith.constant 0 : i32
    return %c0_i32, %c0_i32_0 : i32, i32
  }
  func.func @transform_8(%arg0: i32) -> (i32, i32) {
    %c0_i32 = arith.constant 0 : i32
    %c0_i32_0 = arith.constant 0 : i32
    %c0_i32_1 = arith.constant 0 : i32
    return %c0_i32, %c0_i32_0 : i32, i32
  }
  func.func @transform_9(%arg0: i32) -> (i32, i32) {
    %c0_i32 = arith.constant 0 : i32
    %c0_i32_0 = arith.constant 0 : i32
    return %arg0, %c0_i32 : i32, i32
  }
}

</mosaic_0001>

<llo_original>
// kernel: dqn_forward.1
$region0: #{dqn_forward.1}
  #allocation0 [shape = 'u32[]', space=smem, size = 0x4, offset = 0x4, fixed_abs, tag = 'smem constant byte address 0x4 - core index']
  #allocation1 [shape = 'u32[144,128]{1,0:T(1,128)}', space=vmem, size = 0x12000, scoped, tag = 'internal scratch']
  %s0 = inlined_call_operand.vmem [shape: bf16[8,16], index: 0, kind: input, shape index: {}]
  %s1 = inlined_call_operand.vmem [shape: bf16[16,64], index: 1, kind: input, shape index: {}]
  %s2 = inlined_call_operand.vmem [shape: f32[1,64], index: 2, kind: input, shape index: {}]
  %s3 = inlined_call_operand.vmem [shape: bf16[64,32], index: 3, kind: input, shape index: {}]
  %s4 = inlined_call_operand.vmem [shape: f32[1,32], index: 4, kind: input, shape index: {}]
  %s5 = inlined_call_operand.vmem [shape: bf16[32,8], index: 5, kind: input, shape index: {}]
  %s6 = inlined_call_operand.vmem [shape: f32[1,8], index: 6, kind: input, shape index: {}]
  %s7 = inlined_call_operand.vmem [shape: bf16[8,128], index: 7, kind: input, shape index: {}]
  %s8 = inlined_call_operand.vmem [shape: f32[1,128], index: 8, kind: input, shape index: {}]
  %s9 = inlined_call_operand.vmem [shape: f32[8,128], index: 9, kind: output, shape index: {}]
  %s10 = sld [smem:[#allocation0]]
  $region46: #{dqn_forward.1} parent=0
    _
  %s12 = ssub.s32 1, %s10
  %s13 = scalar_select 0, %s12, %s10
  // Predicated region
  $region2: #{dqn_forward.1} parent=0 // pred_check
    _
  $region3: #{dqn_forward.1} parent=0 // pred_check_branch
    %15 = sbr.rel (0) target = $region5
  $region4: #{dqn_forward.1} parent=0 // pred_region
    _
  $region5: #{dqn_forward.1} parent=0 // pred_fallthru
    _
  // Predicated region
  $region6: #{dqn_forward.1} parent=0 // pred_check
    _
  $region7: #{dqn_forward.1} parent=0 // pred_check_branch
    %17 = sbr.rel (0) target = $region9
  $region8: #{dqn_forward.1} parent=0 // pred_region
    _
  $region9: #{dqn_forward.1} parent=0 // pred_fallthru
    _
  // Predicated region
  $region10: #{dqn_forward.1} parent=0 // pred_check
    _
  $region11: #{dqn_forward.1} parent=0 // pred_check_branch
    %19 = sbr.rel (0) target = $region13
  $region12: #{dqn_forward.1} parent=0 // pred_region
    _
  $region13: #{dqn_forward.1} parent=0 // pred_fallthru
    _
  // Predicated region
  $region14: #{dqn_forward.1} parent=0 // pred_check
    _
  $region15: #{dqn_forward.1} parent=0 // pred_check_branch
    %21 = sbr.rel (0) target = $region17
  $region16: #{dqn_forward.1} parent=0 // pred_region
    _
  $region17: #{dqn_forward.1} parent=0 // pred_fallthru
    _
  // Predicated region
  $region18: #{dqn_forward.1} parent=0 // pred_check
    _
  $region19: #{dqn_forward.1} parent=0 // pred_check_branch
    %23 = sbr.rel (0) target = $region21
  $region20: #{dqn_forward.1} parent=0 // pred_region
    _
  $region21: #{dqn_forward.1} parent=0 // pred_fallthru
    _
  // Predicated region
  $region22: #{dqn_forward.1} parent=0 // pred_check
    _
  $region23: #{dqn_forward.1} parent=0 // pred_check_branch
    %25 = sbr.rel (0) target = $region25
  $region24: #{dqn_forward.1} parent=0 // pred_region
    _
  $region25: #{dqn_forward.1} parent=0 // pred_fallthru
    _
  // Predicated region
  $region26: #{dqn_forward.1} parent=0 // pred_check
    _
  $region27: #{dqn_forward.1} parent=0 // pred_check_branch
    %27 = sbr.rel (0) target = $region29
  $region28: #{dqn_forward.1} parent=0 // pred_region
    _
  $region29: #{dqn_forward.1} parent=0 // pred_fallthru
    _
  // Predicated region
  $region30: #{dqn_forward.1} parent=0 // pred_check
    _
  $region31: #{dqn_forward.1} parent=0 // pred_check_branch
    %29 = sbr.rel (0) target = $region33
  $region32: #{dqn_forward.1} parent=0 // pred_region
    _
  $region33: #{dqn_forward.1} parent=0 // pred_fallthru
    _
  // Predicated region
  $region34: #{dqn_forward.1} parent=0 // pred_check
    _
  $region35: #{dqn_forward.1} parent=0 // pred_check_branch
    %31 = sbr.rel (0) target = $region37
  $region36: #{dqn_forward.1} parent=0 // pred_region
    _
  $region37: #{dqn_forward.1} parent=0 // pred_fallthru
    _
  %v33 = vld [vmem:[%s0] sm:$0xf]
  %v34 = vld [vmem:[%s1] sm:$0xf]
  %v35 = vld [vmem:[%s1 + $0x4] sm:$0xf]
  %v36 = vld [vmem:[%s2] sm:$0x1]
  %v38 = vlaneseq
  %v39 = vshrl.u32 %v38, 7
  %v40 = vsub.s32 0, %v39
  %v41 = vrot.slane %v36, %v40
  %v45 = vunpack.c.l.b16 %v34
  %v46 = vunpack.c.l.b16 %v35
  %v47 = vpack.c.b16 %v46, %v45
  %vm49 = vcmask 130048
  %v51 = vsel %vm49, %v33, 0
  %53 = vmatprep.subr.bf16.mxu0 0
  %54 = vmatpush1.bf16.msra.mxu0 %v47
  %55 = vmatprep.subr.bf16.mxu0 0
  %56 = vmatpush1.bf16.msra.mxu0 0
  %57 = vmatprep.subr.bf16.mxu0 0
  %58 = vmatpush1.bf16.msra.mxu0 0
  %59 = vmatprep.subr.bf16.mxu0 0
  %60 = vmatpush1.bf16.msra.mxu0 0
  %61 = vmatprep.subr.bf16.mxu0 0
  %62 = vmatpush1.bf16.msra.mxu0 0
  %63 = vmatprep.subr.bf16.mxu0 0
  %64 = vmatpush1.bf16.msra.mxu0 0
  %65 = vmatprep.subr.bf16.mxu0 0
  %66 = vmatpush1.bf16.msra.mxu0 0
  %67 = vmatprep.subr.bf16.mxu0 0
  %68 = vmatpush1.bf16.msra.mxu0 0
  %69 = vmatprep.subr.bf16.mxu0 0
  %70 = vmatpush1.bf16.msra.mxu0 0
  %71 = vmatprep.subr.bf16.mxu0 0
  %72 = vmatpush1.bf16.msra.mxu0 0
  %73 = vmatprep.subr.bf16.mxu0 0
  %74 = vmatpush1.bf16.msra.mxu0 0
  %75 = vmatprep.subr.bf16.mxu0 0
  %76 = vmatpush1.bf16.msra.mxu0 0
  %77 = vmatprep.subr.bf16.mxu0 0
  %78 = vmatpush1.bf16.msra.mxu0 0
  %79 = vmatprep.subr.bf16.mxu0 0
  %80 = vmatpush1.bf16.msra.mxu0 0
  %81 = vmatprep.subr.bf16.mxu0 0
  %82 = vmatpush1.bf16.msra.mxu0 0
  %83 = vmatprep.subr.bf16.mxu0 0
  %84 = vmatpush1.bf16.msra.mxu0 0
  %85 = vmatprep.mubr.bf16.mxu0 0
  %86 = vmatmul.mubr.bf16.gmra.mrb[0].mxu0 %v51
  %v87 = vpop.f32.mrb[0].mxu0
  %v88 = vadd.f32 %v41, %v87
  %v89 = vpop.f32.mrb[0].mxu0
  %v90 = vpop.f32.mrb[0].mxu0
  %v91 = vpop.f32.mrb[0].mxu0
  %92 = vdwg.mxu0
  %v93 = vmax.f32 %v88, 0.0
  %v94 = vpack.c.bf16 %v93, %v93
  %v95 = vld [vmem:[%s3] sm:$0xf]
  %v96 = vld [vmem:[%s3 + $0x4] sm:$0xf]
  %v97 = vld [vmem:[%s3 + $0x8] sm:$0xf]
  %v98 = vld [vmem:[%s3 + $0xc] sm:$0xf]
  %v99 = vld [vmem:[%s3 + $0x10] sm:$0xf]
  %v100 = vld [vmem:[%s3 + $0x14] sm:$0xf]
  %v101 = vld [vmem:[%s3 + $0x18] sm:$0xf]
  %v102 = vld [vmem:[%s3 + $0x1c] sm:$0xf]
  %v103 = vld [vmem:[%s4] sm:$0x1]
  %v105 = vlaneseq
  %v106 = vshrl.u32 %v105, 7
  %v107 = vsub.s32 0, %v106
  %v108 = vrot.slane %v103, %v107
  %v118 = vunpack.c.l.b16 %v95
  %v119 = vunpack.c.l.b16 %v96
  %v120 = vunpack.c.l.b16 %v97
  %v121 = vunpack.c.l.b16 %v98
  %v122 = vunpack.c.l.b16 %v99
  %v123 = vunpack.c.l.b16 %v100
  %v124 = vunpack.c.l.b16 %v101
  %v125 = vunpack.c.l.b16 %v102
  %v126 = vpack.c.b16 %v119, %v118
  %v127 = vpack.c.b16 %v121, %v120
  %v128 = vpack.c.b16 %v123, %v122
  %v129 = vpack.c.b16 %v125, %v124
  %vm134 = vcmask 523264
  %v136 = vsel %vm134, %v94, 0
  %138 = vmatprep.subr.bf16.mxu0 0
  %139 = vmatpush1.bf16.msra.mxu0 %v126
  %140 = vmatprep.subr.bf16.mxu0 0
  %141 = vmatpush1.bf16.msra.mxu0 %v127
  %142 = vmatprep.subr.bf16.mxu0 0
  %143 = vmatpush1.bf16.msra.mxu0 %v128
  %144 = vmatprep.subr.bf16.mxu0 0
  %145 = vmatpush1.bf16.msra.mxu0 %v129
  %146 = vmatprep.subr.bf16.mxu0 0
  %147 = vmatpush1.bf16.msra.mxu0 0
  %148 = vmatprep.subr.bf16.mxu0 0
  %149 = vmatpush1.bf16.msra.mxu0 0
  %150 = vmatprep.subr.bf16.mxu0 0
  %151 = vmatpush1.bf16.msra.mxu0 0
  %152 = vmatprep.subr.bf16.mxu0 0
  %153 = vmatpush1.bf16.msra.mxu0 0
  %154 = vmatprep.subr.bf16.mxu0 0
  %155 = vmatpush1.bf16.msra.mxu0 0
  %156 = vmatprep.subr.bf16.mxu0 0
  %157 = vmatpush1.bf16.msra.mxu0 0
  %158 = vmatprep.subr.bf16.mxu0 0
  %159 = vmatpush1.bf16.msra.mxu0 0
  %160 = vmatprep.subr.bf16.mxu0 0
  %161 = vmatpush1.bf16.msra.mxu0 0
  %162 = vmatprep.subr.bf16.mxu0 0
  %163 = vmatpush1.bf16.msra.mxu0 0
  %164 = vmatprep.subr.bf16.mxu0 0
  %165 = vmatpush1.bf16.msra.mxu0 0
  %166 = vmatprep.subr.bf16.mxu0 0
  %167 = vmatpush1.bf16.msra.mxu0 0
  %168 = vmatprep.subr.bf16.mxu0 0
  %169 = vmatpush1.bf16.msra.mxu0 0
  %170 = vmatprep.mubr.bf16.mxu0 0
  %171 = vmatmul.mubr.bf16.gmra.mrb[0].mxu0 %v136
  %v172 = vpop.f32.mrb[0].mxu0
  %v173 = vadd.f32 %v108, %v172
  %v174 = vpop.f32.mrb[0].mxu0
  %v175 = vpop.f32.mrb[0].mxu0
  %v176 = vpop.f32.mrb[0].mxu0
  %177 = vdwg.mxu0
  %v178 = vmax.f32 %v173, 0.0
  %v179 = vpack.c.bf16 %v178, %v178
  %v180 = vld [vmem:[%s5] sm:$0xf]
  %v181 = vld [vmem:[%s5 + $0x4] sm:$0xf]
  %v182 = vld [vmem:[%s5 + $0x8] sm:$0xf]
  %v183 = vld [vmem:[%s5 + $0xc] sm:$0xf]
  %v184 = vld [vmem:[%s6] sm:$0x1]
  %v186 = vlaneseq
  %v187 = vshrl.u32 %v186, 7
  %v188 = vsub.s32 0, %v187
  %v189 = vrot.slane %v184, %v188
  %v195 = vunpack.c.l.b16 %v180
  %v196 = vunpack.c.l.b16 %v181
  %v197 = vunpack.c.l.b16 %v182
  %v198 = vunpack.c.l.b16 %v183
  %v199 = vpack.c.b16 %v196, %v195
  %v200 = vpack.c.b16 %v198, %v197
  %vm203 = vcmask 261120
  %v205 = vsel %vm203, %v179, 0
  %207 = vmatprep.subr.bf16.mxu0 0
  %208 = vmatpush1.bf16.msra.mxu0 %v199
  %209 = vmatprep.subr.bf16.mxu0 0
  %210 = vmatpush1.bf16.msra.mxu0 %v200
  %211 = vmatprep.subr.bf16.mxu0 0
  %212 = vmatpush1.bf16.msra.mxu0 0
  %213 = vmatprep.subr.bf16.mxu0 0
  %214 = vmatpush1.bf16.msra.mxu0 0
  %215 = vmatprep.subr.bf16.mxu0 0
  %216 = vmatpush1.bf16.msra.mxu0 0
  %217 = vmatprep.subr.bf16.mxu0 0
  %218 = vmatpush1.bf16.msra.mxu0 0
  %219 = vmatprep.subr.bf16.mxu0 0
  %220 = vmatpush1.bf16.msra.mxu0 0
  %221 = vmatprep.subr.bf16.mxu0 0
  %222 = vmatpush1.bf16.msra.mxu0 0
  %223 = vmatprep.subr.bf16.mxu0 0
  %224 = vmatpush1.bf16.msra.mxu0 0
  %225 = vmatprep.subr.bf16.mxu0 0
  %226 = vmatpush1.bf16.msra.mxu0 0
  %227 = vmatprep.subr.bf16.mxu0 0
  %228 = vmatpush1.bf16.msra.mxu0 0
  %229 = vmatprep.subr.bf16.mxu0 0
  %230 = vmatpush1.bf16.msra.mxu0 0
  %231 = vmatprep.subr.bf16.mxu0 0
  %232 = vmatpush1.bf16.msra.mxu0 0
  %233 = vmatprep.subr.bf16.mxu0 0
  %234 = vmatpush1.bf16.msra.mxu0 0
  %235 = vmatprep.subr.bf16.mxu0 0
  %236 = vmatpush1.bf16.msra.mxu0 0
  %237 = vmatprep.subr.bf16.mxu0 0
  %238 = vmatpush1.bf16.msra.mxu0 0
  %239 = vmatprep.mubr.bf16.mxu0 0
  %240 = vmatmul.mubr.bf16.gmra.mrb[0].mxu0 %v205
  %v241 = vpop.f32.mrb[0].mxu0
  %v242 = vadd.f32 %v189, %v241
  %v243 = vpop.f32.mrb[0].mxu0
  %v244 = vpop.f32.mrb[0].mxu0
  %v245 = vpop.f32.mrb[0].mxu0
  %246 = vdwg.mxu0
  %v247 = vmax.f32 %v242, 0.0
  %v248 = vpack.c.bf16 %v247, %v247
  %v249 = vld [vmem:[%s7] sm:$0xf]
  %v250 = vld [vmem:[%s8] sm:$0x1]
  %v252 = vlaneseq
  %v253 = vshrl.u32 %v252, 7
  %v254 = vsub.s32 0, %v253
  %v255 = vrot.slane %v250, %v254
  %vm257 = vcmask 64512
  %v259 = vsel %vm257, %v248, 0
  %vm261 = vcmask 1043456
  %v263 = vsel %vm261, %v249, 0
  %265 = vmatprep.subr.bf16.mxu0 0
  %266 = vmatpush1.bf16.msra.mxu0 %v263
  %267 = vmatprep.subr.bf16.mxu0 0
  %268 = vmatpush1.bf16.msra.mxu0 0
  %269 = vmatprep.subr.bf16.mxu0 0
  %270 = vmatpush1.bf16.msra.mxu0 0
  %271 = vmatprep.subr.bf16.mxu0 0
  %272 = vmatpush1.bf16.msra.mxu0 0
  %273 = vmatprep.subr.bf16.mxu0 0
  %274 = vmatpush1.bf16.msra.mxu0 0
  %275 = vmatprep.subr.bf16.mxu0 0
  %276 = vmatpush1.bf16.msra.mxu0 0
  %277 = vmatprep.subr.bf16.mxu0 0
  %278 = vmatpush1.bf16.msra.mxu0 0
  %279 = vmatprep.subr.bf16.mxu0 0
  %280 = vmatpush1.bf16.msra.mxu0 0
  %281 = vmatprep.subr.bf16.mxu0 0
  %282 = vmatpush1.bf16.msra.mxu0 0
  %283 = vmatprep.subr.bf16.mxu0 0
  %284 = vmatpush1.bf16.msra.mxu0 0
  %285 = vmatprep.subr.bf16.mxu0 0
  %286 = vmatpush1.bf16.msra.mxu0 0
  %287 = vmatprep.subr.bf16.mxu0 0
  %288 = vmatpush1.bf16.msra.mxu0 0
  %289 = vmatprep.subr.bf16.mxu0 0
  %290 = vmatpush1.bf16.msra.mxu0 0
  %291 = vmatprep.subr.bf16.mxu0 0
  %292 = vmatpush1.bf16.msra.mxu0 0
  %293 = vmatprep.subr.bf16.mxu0 0
  %294 = vmatpush1.bf16.msra.mxu0 0
  %295 = vmatprep.subr.bf16.mxu0 0
  %296 = vmatpush1.bf16.msra.mxu0 0
  %297 = vmatprep.mubr.bf16.mxu0 0
  %298 = vmatmul.mubr.bf16.gmra.mrb[0].mxu0 %v259
  %v299 = vpop.f32.mrb[0].mxu0
  %v300 = vadd.f32 %v255, %v299
  %v301 = vpop.f32.mrb[0].mxu0
  %v302 = vpop.f32.mrb[0].mxu0
  %v303 = vpop.f32.mrb[0].mxu0
  %304 = vdwg.mxu0
  %305 = vst [vmem:[%s9] sm:$0xff] %v300
  // Predicated region
  $region38: #{dqn_forward.1} parent=0 // pred_check
    _
  $region39: #{dqn_forward.1} parent=0 // pred_check_branch
    %307 = sbr.rel (0) target = $region41
  $region40: #{dqn_forward.1} parent=0 // pred_region
    _
  $region41: #{dqn_forward.1} parent=0 // pred_fallthru
    _
  // Predicated region
  $region42: #{dqn_forward.1} parent=0 // pred_check
    _
  $region43: #{dqn_forward.1} parent=0 // pred_check_branch
    %309 = sbr.rel (0) target = $region45
  $region44: #{dqn_forward.1} parent=0 // pred_region
    _
  $region45: #{dqn_forward.1} parent=0 // pred_fallthru
    _

</llo_original>
